<compile_context>
chip_gen: v7x
topology: tpu7x:2x2x1
jax: 0.10.0
libtpu: 0.0.40
codegen_flags: <defaults>
</compile_context>

<pallas_src>
import jax
import jax.numpy as jnp
from jax.experimental import pallas as pl
from jax.experimental.pallas import tpu as pltpu

_LANES = 128                        # minimum lane width
_CANDIDATE_COLS = (1024, 512, 256, 128)   # preferred lane-dense widths


def _swish_kernel(x_ref, o_ref):
    x = x_ref[...]
    # swish = x * sigmoid(x); jax.nn.sigmoid is overflow-safe.  Compute in
    # the input dtype (bf16-native on v6e/v7x; f32 stays f32).
    o_ref[...] = x * jax.nn.sigmoid(x)


def _hw_config():
    """(target_block_bytes, vmem_limit_bytes or None, tensorcores_per_chip)."""
    kind = ""
    try:
        kind = jax.devices()[0].device_kind.lower()
    except Exception:
        pass
    if "v7" in kind or "tpu7" in kind:
        # v7x: ~3.2 TB/s HBM per TC, 64 MiB physical VMEM, 2 TCs per chip.
        return 8 << 20, 48 << 20, 2
    if "v6" in kind:
        # v6e: ~1.4 TB/s HBM, 128 MiB physical VMEM.
        return 8 << 20, 64 << 20, 1
    if "v5p" in kind:
        return 6 << 20, 48 << 20, 1
    if "v5" in kind:
        # v5e: default scoped VMEM is only 16 MiB; smaller blocks plus an
        # explicit 32 MiB limit guarantee headroom for 4 x 3 MiB buffers.
        return 3 << 20, 32 << 20, 1
    # Unknown / older generation: stay small and keep the default VMEM limit.
    return 2 << 20, None, 1


def _choose_block_rows(rows, cols, itemsize, target_block_bytes, num_cores):
    # Sublane packing: 8 rows for 32-bit, 16 for 16-bit, 32 for 8-bit dtypes.
    sub = max(8, 32 // itemsize)
    target_rows = max(sub, (target_block_bytes // (cols * itemsize)) // sub * sub)
    # Guarantee >= num_cores grid steps for non-trivial arrays so the
    # "parallel" grid axis can be sharded across all TensorCores (v7x has 2).
    if num_cores > 1 and rows * cols * itemsize > (2 << 20):
        split_rows = -(-rows // num_cores)         # ceil(rows / num_cores)
        split_rows = -(-split_rows // sub) * sub   # round up to sublane mult.
        target_rows = max(sub, min(target_rows, split_rows))
    if rows <= target_rows:
        return rows            # full-extent block is always a legal shape
    return target_rows         # multiple of `sub`; partial last block is OK


def _swish_2d(x2d, block_rows, vmem_limit_bytes, donate_input):
    rows, cols = x2d.shape
    return pl.pallas_call(
        _swish_kernel,
        out_shape=jax.ShapeDtypeStruct((rows, cols), x2d.dtype),
        grid_spec=pltpu.PrefetchScalarGridSpec(
            num_scalar_prefetch=0,
            grid=(pl.cdiv(rows, block_rows),),
            in_specs=[pl.BlockSpec((block_rows, cols), lambda i: (i, 0))],
            out_specs=pl.BlockSpec((block_rows, cols), lambda i: (i, 0)),
        ),
        compiler_params=pltpu.CompilerParams(
            dimension_semantics=("parallel",),
            vmem_limit_bytes=vmem_limit_bytes,
        ),
        # Only alias in->out when the caller can actually donate `x`;
        # otherwise XLA would insert a defensive copy (extra HBM traffic).
        input_output_aliases=({0: 0} if donate_input else {}),
    )(x2d)


def swish(x, *, donate_input=False):
    """Elementwise swish: x * sigmoid(x). Any shape; dtype preserved."""
    orig_shape = x.shape
    n = x.size
    if n == 0:
        return x

    x_flat = x.reshape(-1)                    # free for a contiguous array
    itemsize = jnp.dtype(x.dtype).itemsize
    block_bytes, vmem_limit, num_cores = _hw_config()

    n_main = (n // _LANES) * _LANES
    if n_main == 0:
        # Tiny (<128 elements): not worth a kernel launch.
        return (x_flat * jax.nn.sigmoid(x_flat)).reshape(orig_shape)

    # Widest lane-dense view that divides the (128-multiple) prefix.
    cols = next(c for c in _CANDIDATE_COLS if n_main % c == 0)
    rows = n_main // cols
    block_rows = _choose_block_rows(rows, cols, itemsize, block_bytes, num_cores)

    if n_main == n:
        out_flat = _swish_2d(
            x_flat.reshape(rows, cols), block_rows, vmem_limit, donate_input
        ).reshape(-1)
    else:
        # Ragged: kernel over the largest 128-multiple prefix, <=127-element
        # tail in plain jnp (no full-tensor pad / slice round trip).
        main = _swish_2d(
            x_flat[:n_main].reshape(rows, cols), block_rows, vmem_limit, False
        ).reshape(-1)
        tail = x_flat[n_main:]
        out_flat = jnp.concatenate([main, tail * jax.nn.sigmoid(tail)])

    return out_flat.reshape(orig_shape)


if __name__ == "__main__":
    key = jax.random.PRNGKey(0)
    # NCHW conv activation, matching the PyTorch module's typical usage.
    x = jax.random.normal(key, (2, 4, 16, 16), dtype=jnp.float32)

    swish_jit = jax.jit(swish)
    y = swish_jit(x)
    jax.block_until_ready(y)

    y_ref = x * jax.nn.sigmoid(x)
    assert y.shape == x.shape and y.dtype == x.dtype
    assert jnp.allclose(y, y_ref, atol=1e-6, rtol=1e-6)

    # Also exercise the ragged (n % 128 != 0) path.
    x2 = jax.random.normal(jax.random.PRNGKey(1), (5, 7, 9), dtype=jnp.float32)
    y2 = jax.jit(swish)(x2)
    jax.block_until_ready(y2)
    assert y2.shape == x2.shape and y2.dtype == x2.dtype
    assert jnp.allclose(y2, x2 * jax.nn.sigmoid(x2), atol=1e-6, rtol=1e-6)

    print("KERNEL_OK")
</pallas_src>

<mosaic_0001>
module attributes {stable_mosaic.version = 11 : i64} {
  func.func @_swish_kernel(%arg0: i32, %arg1: memref<2x1024xf32, #tpu.memory_space<vmem>>, %arg2: memref<2x1024xf32, #tpu.memory_space<vmem>>) attributes {dimension_semantics = [#tpu.dimension_semantics<parallel>], iteration_bounds = array<i64: 1>, scalar_prefetch = 0 : i64, scratch_operands = 0 : i64, tpu.core_type = #tpu.core_type<tc>, window_params = [{transform_indices = @transform_0, window_bounds = array<i64: 2, 1024>}, {transform_indices = @transform_1, window_bounds = array<i64: 2, 1024>}]} {
    %c0 = arith.constant 0 : index
    %c0_0 = arith.constant 0 : index
    %0 = vector.load %arg1[%c0, %c0_0] : memref<2x1024xf32, #tpu.memory_space<vmem>>, vector<2x1024xf32>
    %1 = arith.negf %0 : vector<2x1024xf32>
    %2 = math.exp %1 : vector<2x1024xf32>
    %cst = arith.constant 1.000000e+00 : f32
    %3 = vector.broadcast %cst : f32 to vector<2x1024xf32>
    %4 = arith.addf %3, %2 : vector<2x1024xf32>
    %5 = arith.divf %3, %4 : vector<2x1024xf32>
    %6 = arith.mulf %0, %5 : vector<2x1024xf32>
    %c0_1 = arith.constant 0 : index
    %c0_2 = arith.constant 0 : index
    %7 = vector.load %arg2[%c0_1, %c0_2] : memref<2x1024xf32, #tpu.memory_space<vmem>>, vector<2x1024xf32>
    tpu.vector_store %arg2[%c0_1, %c0_2], %6 {strides = array<i32>} : memref<2x1024xf32, #tpu.memory_space<vmem>>, vector<2x1024xf32>,
    return
  }
  func.func @transform_0(%arg0: i32) -> (i32, i32) {
    %c0_i32 = arith.constant 0 : i32
    %c0_i32_0 = arith.constant 0 : i32
    return %arg0, %c0_i32 : i32, i32
  }
  func.func @transform_1(%arg0: i32) -> (i32, i32) {
    %c0_i32 = arith.constant 0 : i32
    %c0_i32_0 = arith.constant 0 : i32
    return %arg0, %c0_i32 : i32, i32
  }
}

</mosaic_0001>

<llo_original>
// kernel: swish.1
$region0: #{swish.1}
  #allocation0 [shape = 'u32[]', space=smem, size = 0x4, offset = 0x4, fixed_abs, tag = 'smem constant byte address 0x4 - core index']
  #allocation1 [shape = 'u32[144,128]{1,0:T(1,128)}', space=vmem, size = 0x12000, scoped, tag = 'internal scratch']
  %s0 = inlined_call_operand.vmem [shape: f32[2,1024], index: 0, kind: input, shape index: {}]
  %s1 = inlined_call_operand.vmem [shape: f32[2,1024], index: 1, kind: output, shape index: {}]
  %s2 = sld [smem:[#allocation0]]
  $region14: #{swish.1} parent=0
    _
  %s4 = ssub.s32 1, %s2
  %s5 = scalar_select 0, %s4, %s2
  // Predicated region
  $region2: #{swish.1} parent=0 // pred_check
    _
  $region3: #{swish.1} parent=0 // pred_check_branch
    %7 = sbr.rel (0) target = $region5
  $region4: #{swish.1} parent=0 // pred_region
    _
  $region5: #{swish.1} parent=0 // pred_fallthru
    _
  %v8 = vld [vmem:[%s0] sm:$0xff]
  %v9 = vld [vmem:[%s0 + $0x8] sm:$0xff]
  %v10 = vxor.u32 %v8, 2147483648
  %v11 = vxor.u32 %v9, 2147483648
  %v12 = vmul.f32 %v10, 1.442695
  %v13 = vpow.pop %v12
  %v14 = vmul.f32 %v11, 1.442695
  %v15 = vpow.pop %v14
  %v16 = vadd.f32 %v13, 1.0
  %v17 = vadd.f32 %v15, 1.0
  %v18 = vrcp.pop %v16
  %v19 = vmul.f32 1.0, %v18
  %v20 = vrcp.pop %v17
  %v21 = vmul.f32 1.0, %v20
  %v22 = vmul.f32 %v8, %v19
  %v23 = vmul.f32 %v9, %v21
  %24 = vst [vmem:[%s1] sm:$0xff] %v22
  %25 = vst [vmem:[%s1 + $0x8] sm:$0xff] %v23
  // Predicated region
  $region6: #{swish.1} parent=0 // pred_check
    _
  $region7: #{swish.1} parent=0 // pred_check_branch
    %27 = sbr.rel (0) target = $region9
  $region8: #{swish.1} parent=0 // pred_region
    _
  $region9: #{swish.1} parent=0 // pred_fallthru
    _
  // Predicated region
  $region10: #{swish.1} parent=0 // pred_check
    _
  $region11: #{swish.1} parent=0 // pred_check_branch
    %29 = sbr.rel (0) target = $region13
  $region12: #{swish.1} parent=0 // pred_region
    _
  $region13: #{swish.1} parent=0 // pred_fallthru
    _

</llo_original>
